<compile_context>
chip_gen: v6e
topology: v6e:2x2x1
jax: 0.10.0
libtpu: 0.0.40
codegen_flags: <defaults>
</compile_context>

<pallas_src>
import jax
import jax.numpy as jnp
from jax.experimental import pallas as pl
from jax.experimental.pallas import tpu as pltpu

H_PAD = 128  # MXU / vreg lane width — padded hidden width


def mlp_kernel(x_ref,
               w1_ref, b1_ref,
               w2_ref, b2_ref,
               w3_ref, b3_ref,
               w4_ref, b4_ref,
               o_ref):
    """Fused 4-layer MLP on one (TB, num_inputs) batch tile.

    Hidden weights are bf16 MXU operands; accumulation, bias add, ReLU and
    sigmoid run in f32. Hidden dims are zero-padded to 128 lanes, so padded
    lanes carry exact zeros through ReLU and contribute nothing. The final
    Linear(64, 1) is a rank-1 contraction done as VPU mul + lane reduce.
    """
    # Layer 1: (TB, num_inputs) @ (num_inputs, 128)
    x = x_ref[...].astype(jnp.bfloat16)
    h = jnp.dot(x, w1_ref[...], preferred_element_type=jnp.float32) + b1_ref[...]
    h = jnp.maximum(h, 0.0)

    # Layer 2: (TB, 128) @ (128, 128)
    h = jnp.dot(h.astype(jnp.bfloat16), w2_ref[...],
                preferred_element_type=jnp.float32) + b2_ref[...]
    h = jnp.maximum(h, 0.0)

    # Layer 3: (TB, 128) @ (128, 128)
    h = jnp.dot(h.astype(jnp.bfloat16), w3_ref[...],
                preferred_element_type=jnp.float32) + b3_ref[...]
    h = jnp.maximum(h, 0.0)

    # Output layer (out_features = 1): single weight column as a (1, 128) row,
    # broadcast-multiply on the VPU + cross-lane sum on the XLU -> (TB, 1).
    z = jnp.sum(h * w4_ref[...], axis=-1, keepdims=True) + b4_ref[...]
    o_ref[...] = jax.nn.sigmoid(z)


def neural_network_forward(x, params, *, block_batch=1024):
    """Batch-tiled pallas_call; weights resident, activations pipelined."""
    w1, b1, w2, b2, w3, b3, w4_row, b4 = params
    batch, num_inputs = x.shape

    # Batch tile: multiple of 8 (sublane constraint), capped at block_batch.
    tb = min(block_batch, max(8, ((batch + 7) // 8) * 8))
    n_blocks = (batch + tb - 1) // tb
    padded_batch = n_blocks * tb
    if padded_batch != batch:
        x = jnp.pad(x, ((0, padded_batch - batch), (0, 0)))

    # bf16 MXU operands (halves weight DMA, doubles MXU rate on v6e/v7x);
    # biases and the final weight row stay f32 for the VPU path.
    w1, w2, w3 = (w.astype(jnp.bfloat16) for w in (w1, w2, w3))

    const = lambda i: (0, 0)  # weights/biases: same block every step -> resident
    weight_specs = [
        pl.BlockSpec(w1.shape, const), pl.BlockSpec(b1.shape, const),
        pl.BlockSpec(w2.shape, const), pl.BlockSpec(b2.shape, const),
        pl.BlockSpec(w3.shape, const), pl.BlockSpec(b3.shape, const),
        pl.BlockSpec(w4_row.shape, const), pl.BlockSpec(b4.shape, const),
    ]

    flops = 2 * padded_batch * (num_inputs * H_PAD + 2 * H_PAD * H_PAD + H_PAD)
    bytes_accessed = (
        padded_batch * num_inputs * 4                       # x (f32)
        + padded_batch * 1 * 4                              # output (f32, 1 col)
        + sum(int(w.size) * 2 for w in (w1, w2, w3))        # bf16 weights
        + int(w4_row.size) * 4                              # f32 final row
        + sum(int(b.size) * 4 for b in (b1, b2, b3, b4)))   # f32 biases
    cost = pl.CostEstimate(flops=flops,
                           transcendentals=padded_batch,
                           bytes_accessed=bytes_accessed)

    out_padded = pl.pallas_call(
        mlp_kernel,
        out_shape=jax.ShapeDtypeStruct((padded_batch, 1), jnp.float32),
        grid_spec=pltpu.PrefetchScalarGridSpec(
            num_scalar_prefetch=0,
            grid=(n_blocks,),
            in_specs=[pl.BlockSpec((tb, num_inputs), lambda i: (i, 0))]
                     + weight_specs,
            out_specs=pl.BlockSpec((tb, 1), lambda i: (i, 0)),
        ),
        compiler_params=pltpu.CompilerParams(
            dimension_semantics=("parallel",),
        ),
        cost_estimate=cost,
    )(x, w1, b1, w2, b2, w3, b3, w4_row, b4)

    # Logical result: original batch rows, shape (batch, 1).
    return out_padded[:batch]


def init_params(key, num_inputs, num_hidden=3, hidden_size=64, pad_to=H_PAD):
    """PyTorch-style uniform(-1/sqrt(fan_in), 1/sqrt(fan_in)) init, zero-padded
    to the 128-lane layout the kernel expects.

    Hidden weights are stored [in_features, out_features] (transpose of
    PyTorch's [out, in]); biases as [1, out_features]. The final layer's
    single weight column is stored as a (1, 128) row for the VPU contraction.
    """
    assert num_hidden == 3, "kernel is specialized for num_hidden=3"

    def layer(k, fan_in, fan_out):
        bound = 1.0 / (fan_in ** 0.5)
        kw, kb = jax.random.split(k)
        w = jax.random.uniform(kw, (fan_in, fan_out), jnp.float32, -bound, bound)
        b = jax.random.uniform(kb, (1, fan_out), jnp.float32, -bound, bound)
        return w, b

    k1, k2, k3, k4 = jax.random.split(key, 4)
    w1, b1 = layer(k1, num_inputs, hidden_size)
    w2, b2 = layer(k2, hidden_size, hidden_size)
    w3, b3 = layer(k3, hidden_size, hidden_size)
    w4, b4 = layer(k4, hidden_size, 1)

    pad_h = pad_to - hidden_size
    w1 = jnp.pad(w1, ((0, 0), (0, pad_h)))
    b1 = jnp.pad(b1, ((0, 0), (0, pad_h)))
    w2 = jnp.pad(w2, ((0, pad_h), (0, pad_h)))
    b2 = jnp.pad(b2, ((0, 0), (0, pad_h)))
    w3 = jnp.pad(w3, ((0, pad_h), (0, pad_h)))
    b3 = jnp.pad(b3, ((0, 0), (0, pad_h)))
    w4_row = jnp.pad(w4.T, ((0, 0), (0, pad_h)))   # (1, 128), padded lanes zero
    return (w1, b1, w2, b2, w3, b3, w4_row, b4)


def _reference_forward(x, params):
    """Pure-JAX f32 reference (eval semantics) on the padded params."""
    w1, b1, w2, b2, w3, b3, w4_row, b4 = params
    h = jnp.maximum(x @ w1 + b1, 0.0)
    h = jnp.maximum(h @ w2 + b2, 0.0)
    h = jnp.maximum(h @ w3 + b3, 0.0)
    z = jnp.sum(h * w4_row, axis=-1, keepdims=True) + b4
    return jax.nn.sigmoid(z)


if __name__ == "__main__":
    key = jax.random.PRNGKey(0)
    k_x, k_p = jax.random.split(key)

    batch = 8
    num_inputs = 4
    num_hidden = 3
    hidden_size = 64

    x = jax.random.normal(k_x, (batch, num_inputs), dtype=jnp.float32)
    params = init_params(k_p, num_inputs, num_hidden, hidden_size)

    out = neural_network_forward(x, params)
    jax.block_until_ready(out)

    # sanity: shape (batch, 1), finite, in [0, 1] (inclusive: f32 sigmoid can
    # round to exactly 0.0/1.0 for large-magnitude logits)
    assert out.shape == (batch, 1), out.shape
    assert bool(jnp.all(jnp.isfinite(out)))
    assert bool(jnp.all((out >= 0.0) & (out <= 1.0)))

    # loose numerical check vs f32 reference (bf16 dot operands in kernel)
    ref = _reference_forward(x, params)
    assert bool(jnp.all(jnp.abs(out - ref) < 3e-2))

    print("KERNEL_OK")
</pallas_src>

<mosaic_0001>
module attributes {stable_mosaic.version = 11 : i64} {
  func.func @mlp_kernel(%arg0: i32, %arg1: memref<8x4xf32, #tpu.memory_space<vmem>>, %arg2: memref<4x128xbf16, #tpu.memory_space<vmem>>, %arg3: memref<1x128xf32, #tpu.memory_space<vmem>>, %arg4: memref<128x128xbf16, #tpu.memory_space<vmem>>, %arg5: memref<1x128xf32, #tpu.memory_space<vmem>>, %arg6: memref<128x128xbf16, #tpu.memory_space<vmem>>, %arg7: memref<1x128xf32, #tpu.memory_space<vmem>>, %arg8: memref<1x128xf32, #tpu.memory_space<vmem>>, %arg9: memref<1x1xf32, #tpu.memory_space<vmem>>, %arg10: memref<8x1xf32, #tpu.memory_space<vmem>>) attributes {dimension_semantics = [#tpu.dimension_semantics<parallel>], iteration_bounds = array<i64: 1>, scalar_prefetch = 0 : i64, scratch_operands = 0 : i64, tpu.core_type = #tpu.core_type<tc>, window_params = [{transform_indices = @transform_0, window_bounds = array<i64: 8, 4>}, {pipeline_mode = #tpu.pipeline_mode<synchronous>, transform_indices = @transform_1, window_bounds = array<i64: 4, 128>}, {pipeline_mode = #tpu.pipeline_mode<synchronous>, transform_indices = @transform_2, window_bounds = array<i64: 1, 128>}, {pipeline_mode = #tpu.pipeline_mode<synchronous>, transform_indices = @transform_3, window_bounds = array<i64: 128, 128>}, {pipeline_mode = #tpu.pipeline_mode<synchronous>, transform_indices = @transform_4, window_bounds = array<i64: 1, 128>}, {pipeline_mode = #tpu.pipeline_mode<synchronous>, transform_indices = @transform_5, window_bounds = array<i64: 128, 128>}, {pipeline_mode = #tpu.pipeline_mode<synchronous>, transform_indices = @transform_6, window_bounds = array<i64: 1, 128>}, {pipeline_mode = #tpu.pipeline_mode<synchronous>, transform_indices = @transform_7, window_bounds = array<i64: 1, 128>}, {pipeline_mode = #tpu.pipeline_mode<synchronous>, transform_indices = @transform_8, window_bounds = array<i64: 1, 1>}, {transform_indices = @transform_9, window_bounds = array<i64: 8, 1>}]} {
    %c0 = arith.constant 0 : index
    %c0_0 = arith.constant 0 : index
    %0 = vector.load %arg1[%c0, %c0_0] : memref<8x4xf32, #tpu.memory_space<vmem>>, vector<8x4xf32>
    %1 = arith.truncf %0 : vector<8x4xf32> to vector<8x4xbf16>
    %c0_1 = arith.constant 0 : index
    %c0_2 = arith.constant 0 : index
    %2 = vector.load %arg2[%c0_1, %c0_2] : memref<4x128xbf16, #tpu.memory_space<vmem>>, vector<4x128xbf16>
    %cst = arith.constant dense<0.000000e+00> : vector<8x128xf32>
    %3 = tpu.matmul %1, %2, %cst {dimension_numbers = #tpu.dot_dimension_numbers<[1], [0], [0], [1], [0, 0, 1, 1], [], []>} : vector<8x4xbf16>, vector<4x128xbf16>, vector<8x128xf32> -> vector<8x128xf32>
    %c0_3 = arith.constant 0 : index
    %c0_4 = arith.constant 0 : index
    %4 = vector.load %arg3[%c0_3, %c0_4] : memref<1x128xf32, #tpu.memory_space<vmem>>, vector<1x128xf32>
    %5 = vector.broadcast %4 : vector<1x128xf32> to vector<8x128xf32>
    %6 = arith.addf %3, %5 : vector<8x128xf32>
    %cst_5 = arith.constant 0.000000e+00 : f32
    %7 = vector.broadcast %cst_5 : f32 to vector<8x128xf32>
    %8 = arith.maximumf %6, %7 : vector<8x128xf32>
    %9 = arith.truncf %8 : vector<8x128xf32> to vector<8x128xbf16>
    %c0_6 = arith.constant 0 : index
    %c0_7 = arith.constant 0 : index
    %10 = vector.load %arg4[%c0_6, %c0_7] : memref<128x128xbf16, #tpu.memory_space<vmem>>, vector<128x128xbf16>
    %cst_8 = arith.constant dense<0.000000e+00> : vector<8x128xf32>
    %11 = tpu.matmul %9, %10, %cst_8 {dimension_numbers = #tpu.dot_dimension_numbers<[1], [0], [0], [1], [0, 0, 1, 1], [], []>} : vector<8x128xbf16>, vector<128x128xbf16>, vector<8x128xf32> -> vector<8x128xf32>
    %c0_9 = arith.constant 0 : index
    %c0_10 = arith.constant 0 : index
    %12 = vector.load %arg5[%c0_9, %c0_10] : memref<1x128xf32, #tpu.memory_space<vmem>>, vector<1x128xf32>
    %13 = vector.broadcast %12 : vector<1x128xf32> to vector<8x128xf32>
    %14 = arith.addf %11, %13 : vector<8x128xf32>
    %cst_11 = arith.constant 0.000000e+00 : f32
    %15 = vector.broadcast %cst_11 : f32 to vector<8x128xf32>
    %16 = arith.maximumf %14, %15 : vector<8x128xf32>
    %17 = arith.truncf %16 : vector<8x128xf32> to vector<8x128xbf16>
    %c0_12 = arith.constant 0 : index
    %c0_13 = arith.constant 0 : index
    %18 = vector.load %arg6[%c0_12, %c0_13] : memref<128x128xbf16, #tpu.memory_space<vmem>>, vector<128x128xbf16>
    %cst_14 = arith.constant dense<0.000000e+00> : vector<8x128xf32>
    %19 = tpu.matmul %17, %18, %cst_14 {dimension_numbers = #tpu.dot_dimension_numbers<[1], [0], [0], [1], [0, 0, 1, 1], [], []>} : vector<8x128xbf16>, vector<128x128xbf16>, vector<8x128xf32> -> vector<8x128xf32>
    %c0_15 = arith.constant 0 : index
    %c0_16 = arith.constant 0 : index
    %20 = vector.load %arg7[%c0_15, %c0_16] : memref<1x128xf32, #tpu.memory_space<vmem>>, vector<1x128xf32>
    %21 = vector.broadcast %20 : vector<1x128xf32> to vector<8x128xf32>
    %22 = arith.addf %19, %21 : vector<8x128xf32>
    %cst_17 = arith.constant 0.000000e+00 : f32
    %23 = vector.broadcast %cst_17 : f32 to vector<8x128xf32>
    %24 = arith.maximumf %22, %23 : vector<8x128xf32>
    %c0_18 = arith.constant 0 : index
    %c0_19 = arith.constant 0 : index
    %25 = vector.load %arg8[%c0_18, %c0_19] : memref<1x128xf32, #tpu.memory_space<vmem>>, vector<1x128xf32>
    %26 = vector.broadcast %25 : vector<1x128xf32> to vector<8x128xf32>
    %27 = arith.mulf %24, %26 : vector<8x128xf32>
    %cst_20 = arith.constant dense<0.000000e+00> : vector<8xf32>
    %28 = vector.multi_reduction <add>, %27, %cst_20 [1] : vector<8x128xf32> to vector<8xf32>
    %29 = vector.shape_cast %28 : vector<8xf32> to vector<8x1xf32>
    %c0_21 = arith.constant 0 : index
    %c0_22 = arith.constant 0 : index
    %30 = vector.load %arg9[%c0_21, %c0_22] : memref<1x1xf32, #tpu.memory_space<vmem>>, vector<1x1xf32>
    %31 = vector.broadcast %30 : vector<1x1xf32> to vector<8x1xf32>
    %32 = arith.addf %29, %31 : vector<8x1xf32>
    %33 = arith.negf %32 : vector<8x1xf32>
    %34 = math.exp %33 : vector<8x1xf32>
    %cst_23 = arith.constant 1.000000e+00 : f32
    %35 = vector.broadcast %cst_23 : f32 to vector<8x1xf32>
    %36 = arith.addf %35, %34 : vector<8x1xf32>
    %37 = arith.divf %35, %36 : vector<8x1xf32>
    %c0_24 = arith.constant 0 : index
    %c0_25 = arith.constant 0 : index
    %38 = vector.load %arg10[%c0_24, %c0_25] : memref<8x1xf32, #tpu.memory_space<vmem>>, vector<8x1xf32>
    tpu.vector_store %arg10[%c0_24, %c0_25], %37 {strides = array<i32>} : memref<8x1xf32, #tpu.memory_space<vmem>>, vector<8x1xf32>,
    return
  }
  func.func @transform_0(%arg0: i32) -> (i32, i32) {
    %c0_i32 = arith.constant 0 : i32
    %c0_i32_0 = arith.constant 0 : i32
    return %arg0, %c0_i32 : i32, i32
  }
  func.func @transform_1(%arg0: i32) -> (i32, i32) {
    %c0_i32 = arith.constant 0 : i32
    %c0_i32_0 = arith.constant 0 : i32
    %c0_i32_1 = arith.constant 0 : i32
    return %c0_i32, %c0_i32_0 : i32, i32
  }
  func.func @transform_2(%arg0: i32) -> (i32, i32) {
    %c0_i32 = arith.constant 0 : i32
    %c0_i32_0 = arith.constant 0 : i32
    %c0_i32_1 = arith.constant 0 : i32
    return %c0_i32, %c0_i32_0 : i32, i32
  }
  func.func @transform_3(%arg0: i32) -> (i32, i32) {
    %c0_i32 = arith.constant 0 : i32
    %c0_i32_0 = arith.constant 0 : i32
    %c0_i32_1 = arith.constant 0 : i32
    return %c0_i32, %c0_i32_0 : i32, i32
  }
  func.func @transform_4(%arg0: i32) -> (i32, i32) {
    %c0_i32 = arith.constant 0 : i32
    %c0_i32_0 = arith.constant 0 : i32
    %c0_i32_1 = arith.constant 0 : i32
    return %c0_i32, %c0_i32_0 : i32, i32
  }
  func.func @transform_5(%arg0: i32) -> (i32, i32) {
    %c0_i32 = arith.constant 0 : i32
    %c0_i32_0 = arith.constant 0 : i32
    %c0_i32_1 = arith.constant 0 : i32
    return %c0_i32, %c0_i32_0 : i32, i32
  }
  func.func @transform_6(%arg0: i32) -> (i32, i32) {
    %c0_i32 = arith.constant 0 : i32
    %c0_i32_0 = arith.constant 0 : i32
    %c0_i32_1 = arith.constant 0 : i32
    return %c0_i32, %c0_i32_0 : i32, i32
  }
  func.func @transform_7(%arg0: i32) -> (i32, i32) {
    %c0_i32 = arith.constant 0 : i32
    %c0_i32_0 = arith.constant 0 : i32
    %c0_i32_1 = arith.constant 0 : i32
    return %c0_i32, %c0_i32_0 : i32, i32
  }
  func.func @transform_8(%arg0: i32) -> (i32, i32) {
    %c0_i32 = arith.constant 0 : i32
    %c0_i32_0 = arith.constant 0 : i32
    %c0_i32_1 = arith.constant 0 : i32
    return %c0_i32, %c0_i32_0 : i32, i32
  }
  func.func @transform_9(%arg0: i32) -> (i32, i32) {
    %c0_i32 = arith.constant 0 : i32
    %c0_i32_0 = arith.constant 0 : i32
    return %arg0, %c0_i32 : i32, i32
  }
}

</mosaic_0001>

<llo_original>
// kernel: tpu_custom_call.1
$region0: #{tpu_custom_call.1}
  #allocation0 [shape = 'u32[]', space=smem, size = 0x4, offset = 0x4, fixed_abs, tag = 'smem constant byte address 0x4 - core index']
  #allocation1 [shape = 'u32[144,128]{1,0:T(1,128)}', space=vmem, size = 0x12000, scoped, tag = 'internal scratch']
  #allocation2 [shape = 'f32[1,1]{1,0:T(1,128)S(1)}', space=vmem, size = 0x200, scoped, tag = 'scoped memory for tpu_custom_call.1']
  %s0 = inlined_call_operand.vmem [shape: f32[8,4], index: 0, kind: input, shape index: {}]
  %s1 = inlined_call_operand.vmem [shape: bf16[4,128], index: 1, kind: input, shape index: {}]
  %s2 = inlined_call_operand.vmem [shape: f32[1,128], index: 2, kind: input, shape index: {}]
  %s3 = inlined_call_operand.hbm [shape: bf16[128,128], index: 3, kind: input, shape index: {}]
  %s4 = inlined_call_operand.vmem [shape: f32[1,128], index: 4, kind: input, shape index: {}]
  %s5 = inlined_call_operand.hbm [shape: bf16[128,128], index: 5, kind: input, shape index: {}]
  %s6 = inlined_call_operand.vmem [shape: f32[1,128], index: 6, kind: input, shape index: {}]
  %s7 = inlined_call_operand.vmem [shape: f32[1,128], index: 7, kind: input, shape index: {}]
  %s8 = inlined_call_operand.<no memory space> [shape: f32[1,1], index: 8, kind: input, shape index: {}]
  %s9 = inlined_call_operand.vmem [shape: f32[8,1], index: 9, kind: output, shape index: {}]
  %s10 = sld [smem:[#allocation0]]
  $region54: #{tpu_custom_call.1} parent=0
    _
  %s12 = ssub.s32 1, %s10
  %s13 = scalar_select 0, %s12, %s10
  %v14 = vstv %s8
  %15 = vst [vmem:[#allocation2] sm:$0x1] %v14
  $region1: #{tpu_custom_call.1} parent=0
    #allocation3 [shape = 'u8[32768]{0}', space=vmem, size = 0x8000, scoped, tag = 'input window, operand 3, single buffered']
    #allocation4 [shape = 's32[1]{0}', space=sflag, size = 0x4, scoped, tag = 'scoped memory for tpu_custom_call.1']
    #allocation5 [shape = 'u8[32768]{0}', space=vmem, size = 0x8000, scoped, tag = 'input window, operand 5, single buffered']
    #allocation6 [shape = 's32[1]{0}', space=sflag, size = 0x4, scoped, tag = 'scoped memory for tpu_custom_call.1']
    %16 = vsyncpa [#allocation4], 0
    %17 = vsyncpa [#allocation6], 0
    // Predicated region
    $region2: #{tpu_custom_call.1} parent=1 // pred_check
      _
    $region3: #{tpu_custom_call.1} parent=1 // pred_check_branch
      %19 = sbr.rel (0) target = $region5
    $region4: #{tpu_custom_call.1} parent=1 // pred_region
      _
    $region5: #{tpu_custom_call.1} parent=1 // pred_fallthru
      _
    // Predicated region
    $region6: #{tpu_custom_call.1} parent=1 // pred_check
      _
    $region7: #{tpu_custom_call.1} parent=1 // pred_check_branch
      %21 = sbr.rel (0) target = $region9
    $region8: #{tpu_custom_call.1} parent=1 // pred_region
      _
    $region9: #{tpu_custom_call.1} parent=1 // pred_fallthru
      _
    // Predicated region
    $region10: #{tpu_custom_call.1} parent=1 // pred_check
      _
    $region11: #{tpu_custom_call.1} parent=1 // pred_check_branch
      %23 = sbr.rel (0) target = $region13
    $region12: #{tpu_custom_call.1} parent=1 // pred_region
      _
    $region13: #{tpu_custom_call.1} parent=1 // pred_fallthru
      _
    // Predicated region
    $region14: #{tpu_custom_call.1} parent=1 // pred_check
      _
    $region15: #{tpu_custom_call.1} parent=1 // pred_check_branch
      %25 = sbr.rel (0) target = $region17
    $region16: #{tpu_custom_call.1} parent=1 // pred_region
      %s27 = ssub.s32 1024, 1024
      %28 = vsyncadd [#allocation4], %s27
      %s29 = sshll.u32 [#allocation3], 4
      %s30 = int_to_ptr.vmem [resolvable:$true] %s29
      %35 = dma.hbm_to_vmem [thread:$0]  %s3, 1024, %s30, [#allocation4], 64, 64, 4
    $region17: #{tpu_custom_call.1} parent=1 // pred_fallthru
      _
    // Predicated region
    $region18: #{tpu_custom_call.1} parent=1 // pred_check
      _
    $region19: #{tpu_custom_call.1} parent=1 // pred_check_branch
      %37 = sbr.rel (0) target = $region21
    $region20: #{tpu_custom_call.1} parent=1 // pred_region
      _
    $region21: #{tpu_custom_call.1} parent=1 // pred_fallthru
      _
    // Predicated region
    $region22: #{tpu_custom_call.1} parent=1 // pred_check
      _
    $region23: #{tpu_custom_call.1} parent=1 // pred_check_branch
      %39 = sbr.rel (0) target = $region25
    $region24: #{tpu_custom_call.1} parent=1 // pred_region
      %s41 = ssub.s32 1024, 1024
      %42 = vsyncadd [#allocation6], %s41
      %s43 = sshll.u32 [#allocation5], 4
      %s44 = int_to_ptr.vmem [resolvable:$true] %s43
      %49 = dma.hbm_to_vmem [thread:$0]  %s5, 1024, %s44, [#allocation6], 64, 64, 4
    $region25: #{tpu_custom_call.1} parent=1 // pred_fallthru
      _
    // Predicated region
    $region26: #{tpu_custom_call.1} parent=1 // pred_check
      _
    $region27: #{tpu_custom_call.1} parent=1 // pred_check_branch
      %51 = sbr.rel (0) target = $region29
    $region28: #{tpu_custom_call.1} parent=1 // pred_region
      _
    $region29: #{tpu_custom_call.1} parent=1 // pred_fallthru
      _
    // Predicated region
    $region30: #{tpu_custom_call.1} parent=1 // pred_check
      _
    $region31: #{tpu_custom_call.1} parent=1 // pred_check_branch
      %53 = sbr.rel (0) target = $region33
    $region32: #{tpu_custom_call.1} parent=1 // pred_region
      _
    $region33: #{tpu_custom_call.1} parent=1 // pred_fallthru
      _
    // Predicated region
    $region34: #{tpu_custom_call.1} parent=1 // pred_check
      _
    $region35: #{tpu_custom_call.1} parent=1 // pred_check_branch
      %55 = sbr.rel (0) target = $region37
    $region36: #{tpu_custom_call.1} parent=1 // pred_region
      _
    $region37: #{tpu_custom_call.1} parent=1 // pred_fallthru
      _
    // Predicated region
    $region38: #{tpu_custom_call.1} parent=1 // pred_check
      _
    $region39: #{tpu_custom_call.1} parent=1 // pred_check_branch
      %57 = sbr.rel (0) target = $region41
    $region40: #{tpu_custom_call.1} parent=1 // pred_region
      %58 = dma.done [#allocation4], 1024
    $region41: #{tpu_custom_call.1} parent=1 // pred_fallthru
      _
    // Predicated region
    $region42: #{tpu_custom_call.1} parent=1 // pred_check
      _
    $region43: #{tpu_custom_call.1} parent=1 // pred_check_branch
      %60 = sbr.rel (0) target = $region45
    $region44: #{tpu_custom_call.1} parent=1 // pred_region
      %61 = dma.done [#allocation6], 1024
    $region45: #{tpu_custom_call.1} parent=1 // pred_fallthru
      _
    %v63 = vld [vmem:[%s0] sm:$0xff]
    %v64 = vpack.c.bf16 %v63, %v63
    %v65 = vld [vmem:[%s1] sm:$0x3]
    %v66 = vld [vmem:[%s2] sm:$0x1]
    %v68 = vlaneseq
    %v69 = vshrl.u32 %v68, 7
    %v70 = vsub.s32 0, %v69
    %v71 = vrot.slane %v66, %v70
    %vm73 = vcmask 31744
    %v75 = vsel %vm73, %v64, 0
    %vm77 = vcmask 1041408
    %v79 = vsel %vm77, %v65, 0
    %81 = vmatprep.subr.bf16.mxu0 0
    %82 = vmatpush1.bf16.msra.mxu0 0
    %83 = vmatprep.subr.bf16.mxu0 0
    %84 = vmatpush1.bf16.msra.mxu0 0
    %85 = vmatprep.subr.bf16.mxu0 0
    %86 = vmatpush1.bf16.msra.mxu0 0
    %87 = vmatprep.subr.bf16.mxu0 0
    %88 = vmatpush1.bf16.msra.mxu0 0
    %89 = vmatprep.subr.bf16.mxu0 0
    %90 = vmatpush1.bf16.msra.mxu0 0
    %91 = vmatprep.subr.bf16.mxu0 0
    %92 = vmatpush1.bf16.msra.mxu0 0
    %93 = vmatprep.subr.bf16.mxu0 0
    %94 = vmatpush1.bf16.msra.mxu0 0
    %95 = vmatprep.subr.bf16.mxu0 0
    %96 = vmatpush1.bf16.msra.mxu0 %v79
    %97 = vmatprep.subr.bf16.mxu0 0
    %98 = vmatpush2.bf16.msra.mxu0 0
    %99 = vmatprep.subr.bf16.mxu0 0
    %100 = vmatpush2.bf16.msra.mxu0 0
    %101 = vmatprep.subr.bf16.mxu0 0
    %102 = vmatpush2.bf16.msra.mxu0 0
    %103 = vmatprep.subr.bf16.mxu0 0
    %104 = vmatpush2.bf16.msra.mxu0 0
    %105 = vmatprep.subr.bf16.mxu0 0
    %106 = vmatpush2.bf16.msra.mxu0 0
    %107 = vmatprep.subr.bf16.mxu0 0
    %108 = vmatpush2.bf16.msra.mxu0 0
    %109 = vmatprep.subr.bf16.mxu0 0
    %110 = vmatpush2.bf16.msra.mxu0 0
    %111 = vmatprep.subr.bf16.mxu0 0
    %112 = vmatpush2.bf16.msra.mxu0 0
    %113 = vmatprep.mubr.bf16.mxu0 0
    %114 = vmatmul.mubr.bf16.gmra.mxu0 %v75
    %v115 = vpop.f32.mrf.mxu0
    %v116 = vadd.f32 %v71, %v115
    %v117 = vpop.f32.mrf.mxu0
    %v118 = vpop.f32.mrf.mxu0
    %v119 = vpop.f32.mrf.mxu0
    %120 = vdwg.mxu0
    %v121 = vmax.f32 %v116, 0.0
    %v122 = vpack.c.bf16 %v121, %v121
    %v123 = vld [vmem:[#allocation3] sm:$0xf]
    %v124 = vld [vmem:[#allocation3 + $0x4] sm:$0xf]
    %v125 = vld [vmem:[#allocation3 + $0x8] sm:$0xf]
    %v126 = vld [vmem:[#allocation3 + $0xc] sm:$0xf]
    %v127 = vld [vmem:[#allocation3 + $0x10] sm:$0xf]
    %v128 = vld [vmem:[#allocation3 + $0x14] sm:$0xf]
    %v129 = vld [vmem:[#allocation3 + $0x18] sm:$0xf]
    %v130 = vld [vmem:[#allocation3 + $0x1c] sm:$0xf]
    %v131 = vld [vmem:[#allocation3 + $0x20] sm:$0xf]
    %v132 = vld [vmem:[#allocation3 + $0x24] sm:$0xf]
    %v133 = vld [vmem:[#allocation3 + $0x28] sm:$0xf]
    %v134 = vld [vmem:[#allocation3 + $0x2c] sm:$0xf]
    %v135 = vld [vmem:[#allocation3 + $0x30] sm:$0xf]
    %v136 = vld [vmem:[#allocation3 + $0x34] sm:$0xf]
    %v137 = vld [vmem:[#allocation3 + $0x38] sm:$0xf]
    %v138 = vld [vmem:[#allocation3 + $0x3c] sm:$0xf]
    %v139 = vld [vmem:[%s4] sm:$0x1]
    %v141 = vlaneseq
    %v142 = vshrl.u32 %v141, 7
    %v143 = vsub.s32 0, %v142
    %v144 = vrot.slane %v139, %v143
    %v162 = vunpack.c.l.b16 %v123
    %v163 = vunpack.c.l.b16 %v124
    %v164 = vunpack.c.l.b16 %v125
    %v165 = vunpack.c.l.b16 %v126
    %v166 = vunpack.c.l.b16 %v127
    %v167 = vunpack.c.l.b16 %v128
    %v168 = vunpack.c.l.b16 %v129
    %v169 = vunpack.c.l.b16 %v130
    %v170 = vunpack.c.l.b16 %v131
    %v171 = vunpack.c.l.b16 %v132
    %v172 = vunpack.c.l.b16 %v133
    %v173 = vunpack.c.l.b16 %v134
    %v174 = vunpack.c.l.b16 %v135
    %v175 = vunpack.c.l.b16 %v136
    %v176 = vunpack.c.l.b16 %v137
    %v177 = vunpack.c.l.b16 %v138
    %v178 = vpack.c.b16 %v163, %v162
    %v179 = vpack.c.b16 %v165, %v164
    %v180 = vpack.c.b16 %v167, %v166
    %v181 = vpack.c.b16 %v169, %v168
    %v182 = vpack.c.b16 %v171, %v170
    %v183 = vpack.c.b16 %v173, %v172
    %v184 = vpack.c.b16 %v175, %v174
    %v185 = vpack.c.b16 %v177, %v176
    %194 = vmatprep.subr.bf16.mxu0 0
    %195 = vmatpush1.bf16.msra.mxu0 %v185
    %196 = vmatprep.subr.bf16.mxu0 0
    %197 = vmatpush1.bf16.msra.mxu0 %v184
    %198 = vmatprep.subr.bf16.mxu0 0
    %199 = vmatpush1.bf16.msra.mxu0 %v183
    %200 = vmatprep.subr.bf16.mxu0 0
    %201 = vmatpush1.bf16.msra.mxu0 %v182
    %202 = vmatprep.subr.bf16.mxu0 0
    %203 = vmatpush1.bf16.msra.mxu0 %v181
    %204 = vmatprep.subr.bf16.mxu0 0
    %205 = vmatpush1.bf16.msra.mxu0 %v180
    %206 = vmatprep.subr.bf16.mxu0 0
    %207 = vmatpush1.bf16.msra.mxu0 %v179
    %208 = vmatprep.subr.bf16.mxu0 0
    %209 = vmatpush1.bf16.msra.mxu0 %v178
    %210 = vmatprep.subr.bf16.mxu0 0
    %211 = vmatpush2.bf16.msra.mxu0 0
    %212 = vmatprep.subr.bf16.mxu0 0
    %213 = vmatpush2.bf16.msra.mxu0 0
    %214 = vmatprep.subr.bf16.mxu0 0
    %215 = vmatpush2.bf16.msra.mxu0 0
    %216 = vmatprep.subr.bf16.mxu0 0
    %217 = vmatpush2.bf16.msra.mxu0 0
    %218 = vmatprep.subr.bf16.mxu0 0
    %219 = vmatpush2.bf16.msra.mxu0 0
    %220 = vmatprep.subr.bf16.mxu0 0
    %221 = vmatpush2.bf16.msra.mxu0 0
    %222 = vmatprep.subr.bf16.mxu0 0
    %223 = vmatpush2.bf16.msra.mxu0 0
    %224 = vmatprep.subr.bf16.mxu0 0
    %225 = vmatpush2.bf16.msra.mxu0 0
    %226 = vmatprep.mubr.bf16.mxu0 0
    %227 = vmatmul.mubr.bf16.gmra.mxu0 %v122
    %v228 = vpop.f32.mrf.mxu0
    %v229 = vadd.f32 %v144, %v228
    %v230 = vpop.f32.mrf.mxu0
    %v231 = vpop.f32.mrf.mxu0
    %v232 = vpop.f32.mrf.mxu0
    %233 = vdwg.mxu0
    %v234 = vmax.f32 %v229, 0.0
    %v235 = vpack.c.bf16 %v234, %v234
    %v236 = vld [vmem:[#allocation5] sm:$0xf]
    %v237 = vld [vmem:[#allocation5 + $0x4] sm:$0xf]
    %v238 = vld [vmem:[#allocation5 + $0x8] sm:$0xf]
    %v239 = vld [vmem:[#allocation5 + $0xc] sm:$0xf]
    %v240 = vld [vmem:[#allocation5 + $0x10] sm:$0xf]
    %v241 = vld [vmem:[#allocation5 + $0x14] sm:$0xf]
    %v242 = vld [vmem:[#allocation5 + $0x18] sm:$0xf]
    %v243 = vld [vmem:[#allocation5 + $0x1c] sm:$0xf]
    %v244 = vld [vmem:[#allocation5 + $0x20] sm:$0xf]
    %v245 = vld [vmem:[#allocation5 + $0x24] sm:$0xf]
    %v246 = vld [vmem:[#allocation5 + $0x28] sm:$0xf]
    %v247 = vld [vmem:[#allocation5 + $0x2c] sm:$0xf]
    %v248 = vld [vmem:[#allocation5 + $0x30] sm:$0xf]
    %v249 = vld [vmem:[#allocation5 + $0x34] sm:$0xf]
    %v250 = vld [vmem:[#allocation5 + $0x38] sm:$0xf]
    %v251 = vld [vmem:[#allocation5 + $0x3c] sm:$0xf]
    %v252 = vld [vmem:[%s6] sm:$0x1]
    %v254 = vlaneseq
    %v255 = vshrl.u32 %v254, 7
    %v256 = vsub.s32 0, %v255
    %v257 = vrot.slane %v252, %v256
    %v275 = vunpack.c.l.b16 %v236
    %v276 = vunpack.c.l.b16 %v237
    %v277 = vunpack.c.l.b16 %v238
    %v278 = vunpack.c.l.b16 %v239
    %v279 = vunpack.c.l.b16 %v240
    %v280 = vunpack.c.l.b16 %v241
    %v281 = vunpack.c.l.b16 %v242
    %v282 = vunpack.c.l.b16 %v243
    %v283 = vunpack.c.l.b16 %v244
    %v284 = vunpack.c.l.b16 %v245
    %v285 = vunpack.c.l.b16 %v246
    %v286 = vunpack.c.l.b16 %v247
    %v287 = vunpack.c.l.b16 %v248
    %v288 = vunpack.c.l.b16 %v249
    %v289 = vunpack.c.l.b16 %v250
    %v290 = vunpack.c.l.b16 %v251
    %v291 = vpack.c.b16 %v276, %v275
    %v292 = vpack.c.b16 %v278, %v277
    %v293 = vpack.c.b16 %v280, %v279
    %v294 = vpack.c.b16 %v282, %v281
    %v295 = vpack.c.b16 %v284, %v283
    %v296 = vpack.c.b16 %v286, %v285
    %v297 = vpack.c.b16 %v288, %v287
    %v298 = vpack.c.b16 %v290, %v289
    %307 = vmatprep.subr.bf16.mxu0 0
    %308 = vmatpush1.bf16.msra.mxu0 %v298
    %309 = vmatprep.subr.bf16.mxu0 0
    %310 = vmatpush1.bf16.msra.mxu0 %v297
    %311 = vmatprep.subr.bf16.mxu0 0
    %312 = vmatpush1.bf16.msra.mxu0 %v296
    %313 = vmatprep.subr.bf16.mxu0 0
    %314 = vmatpush1.bf16.msra.mxu0 %v295
    %315 = vmatprep.subr.bf16.mxu0 0
    %316 = vmatpush1.bf16.msra.mxu0 %v294
    %317 = vmatprep.subr.bf16.mxu0 0
    %318 = vmatpush1.bf16.msra.mxu0 %v293
    %319 = vmatprep.subr.bf16.mxu0 0
    %320 = vmatpush1.bf16.msra.mxu0 %v292
    %321 = vmatprep.subr.bf16.mxu0 0
    %322 = vmatpush1.bf16.msra.mxu0 %v291
    %323 = vmatprep.subr.bf16.mxu0 0
    %324 = vmatpush2.bf16.msra.mxu0 0
    %325 = vmatprep.subr.bf16.mxu0 0
    %326 = vmatpush2.bf16.msra.mxu0 0
    %327 = vmatprep.subr.bf16.mxu0 0
    %328 = vmatpush2.bf16.msra.mxu0 0
    %329 = vmatprep.subr.bf16.mxu0 0
    %330 = vmatpush2.bf16.msra.mxu0 0
    %331 = vmatprep.subr.bf16.mxu0 0
    %332 = vmatpush2.bf16.msra.mxu0 0
    %333 = vmatprep.subr.bf16.mxu0 0
    %334 = vmatpush2.bf16.msra.mxu0 0
    %335 = vmatprep.subr.bf16.mxu0 0
    %336 = vmatpush2.bf16.msra.mxu0 0
    %337 = vmatprep.subr.bf16.mxu0 0
    %338 = vmatpush2.bf16.msra.mxu0 0
    %339 = vmatprep.mubr.bf16.mxu0 0
    %340 = vmatmul.mubr.bf16.gmra.mxu0 %v235
    %v341 = vpop.f32.mrf.mxu0
    %v342 = vadd.f32 %v257, %v341
    %v343 = vpop.f32.mrf.mxu0
    %v344 = vpop.f32.mrf.mxu0
    %v345 = vpop.f32.mrf.mxu0
    %346 = vdwg.mxu0
    %v347 = vmax.f32 %v342, 0.0
    %v348 = vld [vmem:[%s7] sm:$0x1]
    %v350 = vlaneseq
    %v351 = vshrl.u32 %v350, 7
    %v352 = vsub.s32 0, %v351
    %v353 = vrot.slane %v348, %v352
    %v355 = vmul.f32 %v347, %v353
    %356 = vadd.xlane.f32.xlu0 %v355
    %v357 = vpop.xlane.xlu0 %356
    %v358 = vld [vmem:[#allocation2] sm:$0x1]
    %v360 = vlaneseq
    %v361 = vshrl.u32 %v360, 7
    %v362 = vsub.s32 0, %v361
    %v363 = vrot.slane %v358, %v362
    %v365 = vadd.f32 %v357, %v363
    %v366 = vxor.u32 %v365, 2147483648
    %v367 = vmul.f32 %v366, 1.442695
    %v368 = vpow.pop %v367
    %v369 = vadd.f32 %v368, 1.0
    %v370 = vrcp.pop %v369
    %v371 = vmul.f32 1.0, %v370
    %vm372 = vcmask 7168
    %373 = vst.msk [vmem:[%s9] sm:$0xff] %vm372, %v371
    // Predicated region
    $region46: #{tpu_custom_call.1} parent=1 // pred_check
      _
    $region47: #{tpu_custom_call.1} parent=1 // pred_check_branch
      %375 = sbr.rel (0) target = $region49
    $region48: #{tpu_custom_call.1} parent=1 // pred_region
      _
    $region49: #{tpu_custom_call.1} parent=1 // pred_fallthru
      _
    // Predicated region
    $region50: #{tpu_custom_call.1} parent=1 // pred_check
      _
    $region51: #{tpu_custom_call.1} parent=1 // pred_check_branch
      %377 = sbr.rel (0) target = $region53
    $region52: #{tpu_custom_call.1} parent=1 // pred_region
      _
    $region53: #{tpu_custom_call.1} parent=1 // pred_fallthru
      _
    %378 = vsyncpa [#allocation4], 1
    %379 = vsyncpa [#allocation6], 1

</llo_original>
